<compile_context>
chip_gen: v6e
topology: v6e:2x2x1
jax: 0.10.0
libtpu: 0.0.40
codegen_flags: <defaults>
</compile_context>

<pallas_src>
import functools

import jax
import jax.numpy as jnp
from jax.experimental import pallas as pl
from jax.experimental.pallas import tpu as pltpu


_SUBLANE_BY_ITEMSIZE = {4: 8, 2: 16, 1: 32}


def _round_up(x: int, m: int) -> int:
    return ((x + m - 1) // m) * m


def _choose_tb(B: int, c_pad: int, dtype) -> int:
    """Pick the largest row tile that fits a conservative VMEM budget."""
    itemsize = jnp.dtype(dtype).itemsize
    sub = _SUBLANE_BY_ITEMSIZE.get(itemsize, 8)
    # Per-row footprint: double-buffered input + output tiles (I/O dtype) plus
    # ~2 f32 temporaries materialized in the kernel body.
    per_row_bytes = c_pad * (4 * itemsize + 8)
    budget_bytes = 24 * 1024 * 1024  # leaves headroom under v7x's 64 MiB VMEM
    tb = budget_bytes // max(per_row_bytes, 1)
    tb = max(sub, min(1024, (tb // sub) * sub))
    if tb >= B:
        # Don't waste bandwidth on padded rows; when there are enough rows,
        # keep the grid >= 2 so v7x can shard the row axis across its 2 TCs.
        if B >= 2 * sub:
            tb = _round_up(-(-B // 2), sub)
        else:
            tb = _round_up(B, sub)
    return tb


def _softmax_t_kernel(temp_ref, x_ref, o_ref, *, act_f: str, c_valid: int):
    # temp_ref: SMEM scalar (shape (1,), f32). x_ref/o_ref: (tb, C_pad) tiles.
    x = x_ref[...].astype(jnp.float32)
    inv_t = 1.0 / temp_ref[0]           # one scalar reciprocal, not a vector div
    out = x * inv_t

    c_pad = out.shape[1]
    if act_f in ("softmax", "log_softmax"):
        if c_valid != c_pad:
            # Mask lane-padding columns so they never affect max / sum.
            lane = jax.lax.broadcasted_iota(jnp.int32, out.shape, 1)
            out = jnp.where(lane < c_valid, out, -jnp.inf)
        m = jnp.max(out, axis=1, keepdims=True)
        e = jnp.exp(out - m)
        s = jnp.sum(e, axis=1, keepdims=True)
        if act_f == "softmax":
            out = e * pl.reciprocal(s, approx=True)   # EUP vrcp (free slot)
        else:  # log_softmax
            out = (out - m) - jnp.log(s)
    # else: identity -> temperature scaling only, like the PyTorch module.

    o_ref[...] = out.astype(o_ref.dtype)


def softmax_t(x: jax.Array, temperature, act_f: str, *, tb: int | None = None):
    """Pallas equivalent of SoftmaxT.forward(x, act_f) for 2-D (B, C) inputs."""
    B, C = x.shape
    # Keep the scalar in f32 for SMEM prefetch (SMEM scalars are 32-bit).
    temperature = jnp.asarray(temperature, dtype=jnp.float32).reshape((1,))

    c_pad = _round_up(C, 128)           # lane-dense tiles -> unmasked vst
    if tb is None:
        tb = _choose_tb(B, c_pad, x.dtype)
    grid = pl.cdiv(B, tb)
    b_pad = grid * tb

    # TODO(synk): extremely large C (per-row tile exceeding VMEM) would need a
    # C-tiled two-pass reduction; not needed for the shapes exercised here.
    xp = x
    if (b_pad != B) or (c_pad != C):
        xp = jnp.pad(x, ((0, b_pad - B), (0, c_pad - C)))

    kernel = functools.partial(_softmax_t_kernel, act_f=act_f, c_valid=C)

    out = pl.pallas_call(
        kernel,
        out_shape=jax.ShapeDtypeStruct((b_pad, c_pad), x.dtype),
        grid_spec=pltpu.PrefetchScalarGridSpec(
            num_scalar_prefetch=1,      # temperature lives in SMEM
            grid=(grid,),
            in_specs=[pl.BlockSpec((tb, c_pad), lambda i, temp: (i, 0))],
            out_specs=pl.BlockSpec((tb, c_pad), lambda i, temp: (i, 0)),
        ),
        compiler_params=pltpu.CompilerParams(
            dimension_semantics=("parallel",),
            # Raise the scoped VMEM limit (defaults: 16 MiB v5e / 32 MiB v6e,
            # v7x) so big double-buffered tiles are allowed; still <= physical.
            vmem_limit_bytes=64 * 1024 * 1024,
        ),
    )(temperature, xp)

    if (b_pad != B) or (c_pad != C):
        out = out[:B, :C]
    return out


if __name__ == "__main__":
    key = jax.random.PRNGKey(0)
    temperature = 2.5  # deterministic hparam, as in SoftmaxT.__init__

    # Case 1: original small demo shape (exercises lane padding 64 -> 128).
    B, C = 16, 64
    x = jax.random.normal(key, (B, C), dtype=jnp.float32)

    out_sm = jax.block_until_ready(softmax_t(x, temperature, "softmax"))
    out_lsm = jax.block_until_ready(softmax_t(x, temperature, "log_softmax"))
    out_id = jax.block_until_ready(softmax_t(x, temperature, "identity"))

    ref_scaled = x / temperature
    ref_sm = jax.nn.softmax(ref_scaled, axis=1)
    ref_lsm = jax.nn.log_softmax(ref_scaled, axis=1)

    assert jnp.allclose(out_sm, ref_sm, atol=1e-4, rtol=1e-3)
    assert jnp.allclose(out_lsm, ref_lsm, atol=1e-5, rtol=1e-5)
    assert jnp.allclose(out_id, ref_scaled, atol=1e-6, rtol=1e-6)

    # Case 2: ragged shapes (B and C both non-aligned) to exercise row padding
    # via the pl.cdiv grid and the in-kernel lane mask.
    B2, C2 = 13, 200
    x2 = jax.random.normal(jax.random.PRNGKey(1), (B2, C2), dtype=jnp.float32)
    out2 = jax.block_until_ready(softmax_t(x2, temperature, "softmax"))
    ref2 = jax.nn.softmax(x2 / temperature, axis=1)
    assert out2.shape == (B2, C2)
    assert jnp.allclose(out2, ref2, atol=1e-4, rtol=1e-3)

    print("KERNEL_OK")
</pallas_src>

<mosaic_0001>
module attributes {stable_mosaic.version = 11 : i64} {
  func.func @_softmax_t_kernel(%arg0: i32, %arg1: memref<1xf32, #tpu.memory_space<smem>>, %arg2: memref<8x128xf32, #tpu.memory_space<vmem>>, %arg3: memref<8x128xf32, #tpu.memory_space<vmem>>) attributes {dimension_semantics = [#tpu.dimension_semantics<parallel>], iteration_bounds = array<i64: 2>, scalar_prefetch = 1 : i64, scratch_operands = 0 : i64, tpu.core_type = #tpu.core_type<tc>, window_params = [{transform_indices = @transform_0, window_bounds = array<i64: 8, 128>}, {transform_indices = @transform_1, window_bounds = array<i64: 8, 128>}]} {
    %c0 = arith.constant 0 : index
    %c0_0 = arith.constant 0 : index
    %0 = vector.load %arg2[%c0, %c0_0] : memref<8x128xf32, #tpu.memory_space<vmem>>, vector<8x128xf32>
    %c0_1 = arith.constant 0 : index
    %1 = memref.load %arg1[%c0_1] : memref<1xf32, #tpu.memory_space<smem>>
    %cst = arith.constant 1.000000e+00 : f32
    %2 = arith.divf %cst, %1 : f32
    %3 = vector.broadcast %2 : f32 to vector<8x128xf32>
    %4 = arith.mulf %0, %3 : vector<8x128xf32>
    %5 = tpu.iota {dimensions = array<i32: 1>} : vector<8x128xi32>
    %c64_i32 = arith.constant 64 : i32
    %6 = vector.broadcast %c64_i32 : i32 to vector<8x128xi32>
    %7 = arith.cmpi slt, %5, %6 : vector<8x128xi32>
    %cst_2 = arith.constant 0xFF800000 : f32
    %8 = vector.broadcast %cst_2 : f32 to vector<8x128xf32>
    %9 = arith.select %7, %4, %8 : vector<8x128xi1>, vector<8x128xf32>
    %cst_3 = arith.constant dense<0xFF800000> : vector<8xf32>
    %10 = vector.multi_reduction <maximumf>, %9, %cst_3 [1] : vector<8x128xf32> to vector<8xf32>
    %11 = vector.shape_cast %10 : vector<8xf32> to vector<8x1xf32>
    %12 = vector.broadcast %11 : vector<8x1xf32> to vector<8x128xf32>
    %13 = arith.subf %9, %12 : vector<8x128xf32>
    %14 = math.exp %13 : vector<8x128xf32>
    %cst_4 = arith.constant dense<0.000000e+00> : vector<8xf32>
    %15 = vector.multi_reduction <add>, %14, %cst_4 [1] : vector<8x128xf32> to vector<8xf32>
    %16 = vector.shape_cast %15 : vector<8xf32> to vector<8x1xf32>
    %17 = tpu.reciprocal %16 {approx = true} : vector<8x1xf32> -> vector<8x1xf32>
    %18 = vector.broadcast %17 : vector<8x1xf32> to vector<8x128xf32>
    %19 = arith.mulf %14, %18 : vector<8x128xf32>
    %c0_5 = arith.constant 0 : index
    %c0_6 = arith.constant 0 : index
    %20 = vector.load %arg3[%c0_5, %c0_6] : memref<8x128xf32, #tpu.memory_space<vmem>>, vector<8x128xf32>
    tpu.vector_store %arg3[%c0_5, %c0_6], %19 {strides = array<i32>} : memref<8x128xf32, #tpu.memory_space<vmem>>, vector<8x128xf32>,
    return
  }
  func.func @transform_0(%arg0: i32, %arg1: memref<1xf32, #tpu.memory_space<smem>>) -> (i32, i32) {
    %c0_i32 = arith.constant 0 : i32
    %c0_i32_0 = arith.constant 0 : i32
    return %arg0, %c0_i32 : i32, i32
  }
  func.func @transform_1(%arg0: i32, %arg1: memref<1xf32, #tpu.memory_space<smem>>) -> (i32, i32) {
    %c0_i32 = arith.constant 0 : i32
    %c0_i32_0 = arith.constant 0 : i32
    return %arg0, %c0_i32 : i32, i32
  }
}

</mosaic_0001>

<llo_original>
// kernel: tpu_custom_call.1
$region0: #{tpu_custom_call.1}
  #allocation0 [shape = 'u32[]', space=smem, size = 0x4, offset = 0x4, fixed_abs, tag = 'smem constant byte address 0x4 - core index']
  #allocation1 [shape = 'u32[144,128]{1,0:T(1,128)}', space=vmem, size = 0x12000, scoped, tag = 'internal scratch']
  #allocation2 [shape = 's32[1]{0}', space=sflag, size = 0x4, scoped, tag = 'scoped memory for tpu_custom_call.1']
  #allocation3 [shape = 'f32[1]{0:T(128)S(6)}', space=smem, size = 0x200, scoped, tag = 'prefetched SMEM operand 0']
  %s0 = inlined_call_operand.<no memory space> [shape: f32[1], index: 0, kind: input, shape index: {}]
  %s1 = inlined_call_operand.hbm [shape: f32[16,128], index: 1, kind: input, shape index: {}]
  %s2 = inlined_call_operand.hbm [shape: f32[16,128], index: 2, kind: output, shape index: {}]
  %s3 = sld [smem:[#allocation0]]
  $region41: #{tpu_custom_call.1} parent=0
    _
  %s5 = ssub.s32 1, %s3
  %s6 = scalar_select 0, %s5, %s3
  %7 = sst [smem:[#allocation3]] %s0
  $region1: #{tpu_custom_call.1} parent=0
    #allocation4 [shape = 'u8[8192]{0}', space=vmem, size = 0x2000, scoped, tag = 'input window, operand 1']
    #allocation5 [shape = 's32[2]{0}', space=sflag, size = 0x8, scoped, tag = 'scoped memory for tpu_custom_call.1']
    #allocation6 [shape = 's32[2]{0}', space=sflag, size = 0x8, scoped, tag = 'scoped memory for tpu_custom_call.1']
    #allocation7 [shape = 'u8[8192]{0}', space=vmem, size = 0x2000, scoped, tag = 'output window, operand 0']
    %8 = vsyncpa [#allocation5], 0
    %s9 = scalar_lea.sflag [#allocation5], 1
    %10 = vsyncpa %s9, 0
    %11 = vsyncpa [#allocation6], 0
    %s12 = scalar_lea.sflag [#allocation6], 1
    %13 = vsyncpa %s12, 0
    loop: start=0, step=1, limit=4
    $region2: #{tpu_custom_call.1} parent=1 // loop_pre_header
      _
    $region3: #{tpu_custom_call.1} parent=1 // loop_header
      %s15 = sphi 0, %s19
      %p16 = scmp.ge.s32.totalorder %s15, 4
      %s25 = sphi 0, %s27
      %s28 = sphi 0, %s25
      %s29 = sphi 0, %s28
      %s45 = sphi 0, %s29
      %s51 = sphi 0, %s53
      %s54 = sphi 0, %s51
      %s55 = sphi 0, %s54
      %s71 = sphi 0, %s55
    $region4: #{tpu_custom_call.1} parent=1 // loop_header_branch
      %18 = sbr.rel (%p16) target = $region8
    $region5: #{tpu_custom_call.1} parent=1 // loop_body
      %s20 = ssub.s32 %s15, 1
      %s21 = ssub.s32 %s15, 2
      %s22 = sadd.s32 %s15, 1
      %s23 = ssub.s32 %s15, %s22
      %p24 = scmp.eq.s32.totalorder %s23, 0
      %s26 = sadd.s32 %s25, 1
      %s27 = scalar_select %p24, %s25, %s26
      %p30 = pneg %p24
      %p31 = scmp.eq.s32.totalorder %s15, 1
      %p32 = por %p30, %p31
      %p33 = scmp.ne.s32.totalorder %s25, %s28
      %p34 = scmp.eq.s32.totalorder %s15, 0
      %p35 = por %p33, %p34
      %p36 = scmp.ne.s32.totalorder %s25, %s28
      %p37 = scmp.eq.s32.totalorder %s20, 1
      %p38 = por %p36, %p37
      %p39 = scmp.ne.s32.totalorder %s28, %s29
      %p40 = scmp.eq.s32.totalorder %s20, 0
      %p41 = por %p39, %p40
      %p42 = scmp.ne.s32.totalorder %s28, %s29
      %p43 = scmp.eq.s32.totalorder %s21, 1
      %p44 = por %p42, %p43
      %p46 = scmp.ne.s32.totalorder %s29, %s45
      %p47 = scmp.eq.s32.totalorder %s21, 0
      %p48 = por %p46, %p47
      %s49 = ssub.s32 %s15, %s22
      %p50 = scmp.eq.s32.totalorder %s49, 0
      %s52 = sadd.s32 %s51, 1
      %s53 = scalar_select %p50, %s51, %s52
      %p56 = pneg %p50
      %p57 = scmp.eq.s32.totalorder %s15, 1
      %p58 = por %p56, %p57
      %p59 = scmp.ne.s32.totalorder %s51, %s54
      %p60 = scmp.eq.s32.totalorder %s15, 0
      %p61 = por %p59, %p60
      %p62 = scmp.ne.s32.totalorder %s51, %s54
      %p63 = scmp.eq.s32.totalorder %s20, 1
      %p64 = por %p62, %p63
      %p65 = scmp.ne.s32.totalorder %s54, %s55
      %p66 = scmp.eq.s32.totalorder %s20, 0
      %p67 = por %p65, %p66
      %p68 = scmp.ne.s32.totalorder %s54, %s55
      %p69 = scmp.eq.s32.totalorder %s21, 1
      %p70 = por %p68, %p69
      %p72 = scmp.ne.s32.totalorder %s55, %s71
      %p73 = scmp.eq.s32.totalorder %s21, 0
      %p74 = por %p72, %p73
      %p75 = scmp.le.s32.totalorder 1, %s15
      %p76 = scmp.lt.s32.totalorder %s15, 3
      %p77 = pnand %p75, %p76
      %p78 = pneg %p77
      // Predicated region
      $region9: #{tpu_custom_call.1} parent=5 // pred_check
        _
      $region10: #{tpu_custom_call.1} parent=5 // pred_check_branch
        %80 = sbr.rel (%p77) target = $region12
      $region11: #{tpu_custom_call.1} parent=5 // pred_region
        %s81 = ssub.s32 %s15, 1
      $region12: #{tpu_custom_call.1} parent=5 // pred_fallthru
        _
      %p82 = scmp.lt.s32.totalorder %s15, 2
      // Predicated region
      $region13: #{tpu_custom_call.1} parent=5 // pred_check
        %p83 = pneg %p82
      $region14: #{tpu_custom_call.1} parent=5 // pred_check_branch
        %85 = sbr.rel (%p83) target = $region16
      $region15: #{tpu_custom_call.1} parent=5 // pred_region
        // Predicated region
        $region17: #{tpu_custom_call.1} parent=15 // pred_check
          %p86 = pneg %p35
        $region18: #{tpu_custom_call.1} parent=15 // pred_check_branch
          %88 = sbr.rel (%p86) target = $region20
        $region19: #{tpu_custom_call.1} parent=15 // pred_region
          %s89 = sand.u32 %s25, 1
          %s90 = scalar_lea.sflag [#allocation5], %s89
          %s91 = sand.u32 %s25, 1
          %s92 = smul.addr %s91, 8
          %s93 = scalar_lea.vmem [#allocation4], %s92
          %s95 = ssub.s32 128, 128
          %96 = vsyncadd %s90, %s95
          %s97 = smul.addr %s15, 128
          %s98 = scalar_lea.hbm %s1, %s97
          %s100 = sshll.u32 %s93, 4
          %s101 = int_to_ptr.vmem [resolvable:$true] %s100
          %103 = dma.hbm_to_vmem [thread:$0]  %s98, 128, %s101, %s90
        $region20: #{tpu_custom_call.1} parent=15 // pred_fallthru
          _
      $region16: #{tpu_custom_call.1} parent=5 // pred_fallthru
        _
      %p104 = scmp.le.s32.totalorder 1, %s15
      %p105 = scmp.lt.s32.totalorder %s15, 3
      %p106 = pnand %p104, %p105
      %p107 = pneg %p106
      // Predicated region
      $region21: #{tpu_custom_call.1} parent=5 // pred_check
        _
      $region22: #{tpu_custom_call.1} parent=5 // pred_check_branch
        %109 = sbr.rel (%p106) target = $region24
      $region23: #{tpu_custom_call.1} parent=5 // pred_region
        %s110 = ssub.s32 %s15, 1
        %s111 = sand.u32 %s28, 1
        %s112 = scalar_lea.sflag [#allocation5], %s111
        %s113 = sand.u32 %s28, 1
        %s114 = smul.addr %s113, 8
        %s115 = scalar_lea.vmem [#allocation4], %s114
        // Predicated region
        $region25: #{tpu_custom_call.1} parent=23 // pred_check
          %p116 = pneg %p41
        $region26: #{tpu_custom_call.1} parent=23 // pred_check_branch
          %118 = sbr.rel (%p116) target = $region28
        $region27: #{tpu_custom_call.1} parent=23 // pred_region
          %119 = dma.done %s112, 128
        $region28: #{tpu_custom_call.1} parent=23 // pred_fallthru
          _
        %s120 = sand.u32 %s28, 1
        %s121 = scalar_lea.sflag [#allocation5], %s120
        %s122 = sand.u32 %s28, 1
        %s123 = smul.addr %s122, 8
        %s124 = scalar_lea.vmem [#allocation4], %s123
        %p125 = pneg %p41
        %p126 = pneg %p38
        %p127 = pneg %p67
        %p128 = pneg %p64
        %s129 = sand.u32 %s54, 1
        %s130 = scalar_lea.sflag [#allocation6], %s129
        %s131 = sand.u32 %s54, 1
        %s132 = smul.addr %s131, 8
        %s133 = scalar_lea.vmem [#allocation7], %s132
        %v134 = vld [vmem:[%s115] sm:$0xff]
        %s135 = sld [smem:[#allocation3]]
        %v136 = vstv %s135
        %v137 = vrcp.pop %v136
        %s138 = vtos %v137
        %v139 = vstv %s138
        %v140 = vmul.f32 %v134, %v139
        %v141 = vlaneseq
        %v142 = vand.u32 %v141, 127
        %vm143 = vcmp.lt.s32.totalorder %v142, 64
        %v144 = vsel %vm143, %v140, -inf
        %145 = vmax.xlane.f32.xlu0 %v144
        %v146 = vpop.xlane.xlu0 %145
        %v147 = vsub.f32 %v144, %v146
        %v148 = vmul.f32 %v147, 1.442695
        %v149 = vpow.pop %v148
        %150 = vadd.xlane.f32.xlu0 %v149
        %v151 = vpop.xlane.xlu0 %150
        %v152 = vrcp.pop %v151
        %v153 = vmul.f32 %v149, %v152
        %154 = vst [vmem:[%s133] sm:$0xff] %v153
        %s155 = sand.u32 %s54, 1
        %s156 = scalar_lea.sflag [#allocation6], %s155
        %s157 = sand.u32 %s54, 1
        %s158 = smul.addr %s157, 8
        %s159 = scalar_lea.vmem [#allocation7], %s158
        // Predicated region
        $region29: #{tpu_custom_call.1} parent=23 // pred_check
          %p160 = pneg %p64
        $region30: #{tpu_custom_call.1} parent=23 // pred_check_branch
          %162 = sbr.rel (%p160) target = $region32
        $region31: #{tpu_custom_call.1} parent=23 // pred_region
          %s164 = ssub.s32 128, 128
          %165 = vsyncadd %s156, %s164
          %s166 = smul.addr %s20, 128
          %s167 = scalar_lea.hbm %s2, %s166
          %s169 = sshll.u32 %s159, 4
          %s170 = int_to_ptr.vmem [resolvable:$true] %s169
          %172 = dma.vmem_to_hbm [thread:$0]  %s170, 128, %s167, %s156
        $region32: #{tpu_custom_call.1} parent=23 // pred_fallthru
          _
      $region24: #{tpu_custom_call.1} parent=5 // pred_fallthru
        _
      %p173 = scmp.le.s32.totalorder 2, %s15
      // Predicated region
      $region33: #{tpu_custom_call.1} parent=5 // pred_check
        %p174 = pneg %p173
      $region34: #{tpu_custom_call.1} parent=5 // pred_check_branch
        %176 = sbr.rel (%p174) target = $region36
      $region35: #{tpu_custom_call.1} parent=5 // pred_region
        %s177 = ssub.s32 %s15, 2
        // Predicated region
        $region37: #{tpu_custom_call.1} parent=35 // pred_check
          %p178 = pneg %p70
        $region38: #{tpu_custom_call.1} parent=35 // pred_check_branch
          %180 = sbr.rel (%p178) target = $region40
        $region39: #{tpu_custom_call.1} parent=35 // pred_region
          %s181 = sand.u32 %s55, 1
          %s182 = scalar_lea.sflag [#allocation6], %s181
          %s183 = sand.u32 %s55, 1
          %s184 = smul.addr %s183, 8
          %s185 = scalar_lea.vmem [#allocation7], %s184
          %186 = dma.done %s182, 128
        $region40: #{tpu_custom_call.1} parent=35 // pred_fallthru
          _
      $region36: #{tpu_custom_call.1} parent=5 // pred_fallthru
        _
    $region6: #{tpu_custom_call.1} parent=1 // loop_footer
      %s19 = sadd.s32 1, %s15
    $region7: #{tpu_custom_call.1} parent=1 // loop_footer_branch
      %14 = sbr.rel target = $region3
    $region8: #{tpu_custom_call.1} parent=1 // loop_exit
      _
    %187 = vsyncpa [#allocation5], 1
    %s188 = scalar_lea.sflag [#allocation5], 1
    %189 = vsyncpa %s188, 1
    %190 = vsyncpa [#allocation6], 1
    %s191 = scalar_lea.sflag [#allocation6], 1
    %192 = vsyncpa %s191, 1

</llo_original>
